<compile_context>
chip_gen: v7x
topology: tpu7x:2x2x1
jax: 0.10.0
libtpu: 0.0.40
codegen_flags: <defaults>
</compile_context>

<pallas_src>
import functools

import jax
import jax.numpy as jnp
from jax.experimental import pallas as pl
from jax.experimental.pallas import tpu as pltpu


def _round_up(x, m):
    return ((x + m - 1) // m) * m


# ----------------------------------------------------------------------------
# Fused DAG kernel (accumulator form).
#
# x_ref : (1, TM, Cx)        rows = [h0 | g | p], compute dtype (bf16 default)
# w_ref : (1, Kin, steps*C)  rows = [h0 | g | p | pad | state_1 | ... ], cols by step
# o_ref : (1, TM, steps*C)   concatenated per-step outputs
# acc   : (TM, steps*C)      f32 VMEM scratch accumulator
# ----------------------------------------------------------------------------
def _nas_dag_kernel(x_ref, w_ref, o_ref, acc_ref, *, steps, C, Cx, Cx_pad):
    x = x_ref[0]                                          # (TM, Cx)
    SC = steps * C

    # 1) one wide-N matmul: contributions of [h0 | g | p] to every step at once.
    acc_ref[...] = jnp.dot(x, w_ref[0, :Cx, :],
                           preferred_element_type=jnp.float32)

    # 2) propagate each freshly finished state into all later steps.
    #    (static unrolled loop; column block i is complete before it is read)
    for i in range(steps - 1):
        state = acc_ref[:, i * C:(i + 1) * C].astype(x.dtype)      # (TM, C)
        w_i = w_ref[0,
                    Cx_pad + i * C: Cx_pad + (i + 1) * C,
                    (i + 1) * C: SC]                               # (C, (S-1-i)*C)
        acc_ref[:, (i + 1) * C: SC] += jnp.dot(
            state, w_i, preferred_element_type=jnp.float32)

    # 3) single full-width store of all steps' outputs.
    o_ref[0] = acc_ref[...].astype(o_ref.dtype)


def _row_tiling(M, B, target_rows=1024):
    """Row tile TM (multiple of 8, 16 when possible for bf16 sublane packing)
    and padded row count Mp (multiple of TM).  Tries to expose >= 2 grid points
    so both v7x TensorCores get work."""
    TM = min(target_rows, _round_up(M, 16))
    while B * pl.cdiv(M, TM) < 2 and TM >= 32:
        TM //= 2
    TM = max(8, _round_up(TM, 8))
    Mp = _round_up(M, TM)
    return TM, Mp


def _fused_dag(xrows, w_all, *, steps, C, Cx, Cx_pad, TM, out_dtype):
    B, Mp, _ = xrows.shape
    Kin = w_all.shape[1]
    SC = steps * C
    n_mt = Mp // TM

    in_isz = jnp.dtype(xrows.dtype).itemsize
    out_isz = jnp.dtype(out_dtype).itemsize
    flops = 2 * B * Mp * (Cx * SC + (C * C * (steps - 1) * steps) // 2)
    bytes_accessed = (xrows.size * in_isz + w_all.size * in_isz
                      + B * Mp * SC * out_isz)

    # Explicit VMEM budget: double-buffered in/out blocks + f32 accumulator,
    # with headroom; never assume v6e's 128 MiB (v7x physical VMEM is 64 MiB).
    tile_bytes = (2 * (TM * Cx * in_isz + Kin * SC * in_isz + TM * SC * out_isz)
                  + TM * SC * 4)
    vmem_limit = int(min(64 * 1024 * 1024,
                         max(16 * 1024 * 1024, 4 * tile_bytes)))

    kernel = functools.partial(_nas_dag_kernel, steps=steps, C=C,
                               Cx=Cx, Cx_pad=Cx_pad)
    return pl.pallas_call(
        kernel,
        out_shape=jax.ShapeDtypeStruct((B, Mp, SC), out_dtype),
        grid_spec=pltpu.PrefetchScalarGridSpec(
            num_scalar_prefetch=0,
            # b outermost (slowest) so the per-batch weight block stays resident
            # across all row-tile iterations.
            grid=(B, n_mt),
            in_specs=[
                pl.BlockSpec((1, TM, Cx), lambda b, mt: (b, mt, 0)),
                pl.BlockSpec((1, Kin, SC), lambda b, mt: (b, 0, 0)),
            ],
            out_specs=pl.BlockSpec((1, TM, SC), lambda b, mt: (b, mt, 0)),
            scratch_shapes=[pltpu.VMEM((TM, SC), jnp.float32)],
        ),
        compiler_params=pltpu.CompilerParams(
            dimension_semantics=("parallel", "parallel"),
            vmem_limit_bytes=vmem_limit),
        cost_estimate=pl.CostEstimate(
            flops=int(flops), transcendentals=0,
            bytes_accessed=int(bytes_accessed)),
    )(xrows, w_all)


# ----------------------------------------------------------------------------
# NAS_layer forward
# ----------------------------------------------------------------------------
def init_nas_params(key, local_channel, global_channel, pos_channel, num_ops):
    k1, k2, k3 = jax.random.split(key, 3)
    scale = 0.05
    return {
        "W": scale * jax.random.normal(
            k1, (num_ops, local_channel, local_channel), jnp.float32),
        "G": scale * jax.random.normal(
            k2, (num_ops, global_channel, local_channel), jnp.float32),
        "P": scale * jax.random.normal(
            k3, (num_ops, pos_channel, local_channel), jnp.float32),
    }


@functools.partial(jax.jit,
                   static_argnames=("steps", "training", "compute_dtype",
                                    "out_dtype"))
def nas_layer_forward(local_feat, global_feat, pos, ops_weights, params,
                      steps, training=True, compute_dtype=jnp.bfloat16,
                      out_dtype=None):
    B, T, Nb, C = local_feat.shape
    Cg = global_feat.shape[-1]
    Cp = pos.shape[-1]
    M = T * Nb
    SC = steps * C
    Cx = C + Cg + Cp
    Cx_pad = _round_up(Cx, 8)          # sublane-align the state-weight rows
    if out_dtype is None:
        out_dtype = compute_dtype      # bf16 output on the perf path

    # --- op-weight normalization (matches the PyTorch code) ------------------
    if training:
        ops_w = jax.nn.softmax(
            ops_weights - jnp.max(ops_weights, axis=-1, keepdims=True), axis=-1)
    else:
        # TODO(synk): original eval branch is buggy (undefined `ops_weight`);
        # reproduce hard multi-hot mask semantics (ties kept, no renorm).
        wmax = jnp.max(ops_weights, axis=-1, keepdims=True)
        ops_w = jnp.where(ops_weights < wmax,
                          jnp.zeros_like(ops_weights),
                          jnp.ones_like(ops_weights))

    # var_loss = torch.var(torch.sum(ops_weights, 1), 1).mean()  (unbiased var)
    var_loss = jnp.mean(jnp.var(jnp.sum(ops_w, axis=1), axis=1, ddof=1))

    # --- fold the per-batch op mixture into effective per-edge weights -------
    W_eff = jnp.einsum("bek,kio->beio", ops_w, params["W"])   # (B,E,C ,C)
    G_eff = jnp.einsum("bek,kio->beio", ops_w, params["G"])   # (B,E,Cg,C)
    P_eff = jnp.einsum("bek,kio->beio", ops_w, params["P"])   # (B,E,Cp,C)

    # --- column-wise block weight layout (B, Kin, steps*C) -------------------
    # rows: [ h0 (C) | g (Cg) | p (Cp) | pad | state_1 (C) | ... | state_{S-1} (C) ]
    # cols: [ step 0 (C) | step 1 (C) | ... | step S-1 (C) ]
    offs = [i * (i + 1) // 2 for i in range(steps)]
    h0_cols = jnp.concatenate([W_eff[:, offs[i]] for i in range(steps)], axis=-1)
    g_cols = jnp.concatenate(
        [jnp.sum(G_eff[:, offs[i]:offs[i] + i + 1], axis=1) for i in range(steps)],
        axis=-1)
    p_cols = jnp.concatenate(
        [jnp.sum(P_eff[:, offs[i]:offs[i] + i + 1], axis=1) for i in range(steps)],
        axis=-1)
    sections = [h0_cols, g_cols, p_cols]
    if Cx_pad > Cx:
        sections.append(jnp.zeros((B, Cx_pad - Cx, SC), h0_cols.dtype))
    for s in range(1, steps):
        blocks = []
        for k in range(steps):
            if k >= s:
                blocks.append(W_eff[:, offs[k] + s])               # used
            else:
                blocks.append(jnp.zeros((B, C, C), W_eff.dtype))   # never read
        sections.append(jnp.concatenate(blocks, axis=-1))          # (B, C, SC)
    w_all = jnp.concatenate(sections, axis=1).astype(compute_dtype)

    # --- single merged row operand [h0 | g | p] -------------------------------
    # TODO(synk): global_feat is broadcast Nb-fold here; a per-frame (B,T,Cg)
    # operand + in-kernel sublane row-repeat would cut this redundant traffic.
    g_rows = jnp.broadcast_to(global_feat[:, :, None, :], (B, T, Nb, Cg))
    xrows = jnp.concatenate(
        [local_feat.reshape(B, M, C),
         g_rows.reshape(B, M, Cg),
         pos.reshape(B, M, Cp)], axis=-1).astype(compute_dtype)    # (B, M, Cx)

    TM, Mp = _row_tiling(M, B)
    if Mp > M:
        xrows = jnp.pad(xrows, ((0, 0), (0, Mp - M), (0, 0)))

    # --- one fused pallas_call for the whole DAG ------------------------------
    out_flat = _fused_dag(xrows, w_all, steps=steps, C=C, Cx=Cx,
                          Cx_pad=Cx_pad, TM=TM, out_dtype=out_dtype)
    out = out_flat[:, :M].reshape(B, T, Nb, SC)
    return out, var_loss


# ----------------------------------------------------------------------------
# Pure-JAX reference (same math, no Pallas) for a sanity check.
# ----------------------------------------------------------------------------
def nas_layer_ref(local_feat, global_feat, pos, ops_weights, params, steps):
    B, T, Nb, C = local_feat.shape
    ops_w = jax.nn.softmax(
        ops_weights - jnp.max(ops_weights, axis=-1, keepdims=True), axis=-1)
    var_loss = jnp.mean(jnp.var(jnp.sum(ops_w, axis=1), axis=1, ddof=1))
    g_exp = jnp.broadcast_to(global_feat[:, :, None, :],
                             (B, T, Nb, global_feat.shape[-1]))
    states = [local_feat.astype(jnp.float32)]
    offset = 0
    for _ in range(steps):
        contribs = []
        for j, h in enumerate(states):
            w = ops_w[:, offset + j, :]                        # (B, K)
            per_op = (jnp.einsum("btnc,kcd->kbtnd", h, params["W"])
                      + jnp.einsum("btnc,kcd->kbtnd", g_exp, params["G"])
                      + jnp.einsum("btnc,kcd->kbtnd", pos, params["P"]))
            contribs.append(jnp.einsum("bk,kbtnd->btnd", w, per_op))
        offset += len(states)
        states.append(sum(contribs))
    out = jnp.concatenate(states[1:], axis=-1)
    return out, var_loss


if __name__ == "__main__":
    # Shapes consistent with the module's forward():
    #   local_feat : (batch, time, box_per_frame, local_channel)
    #   global_feat: (batch, time, global_channel)
    #   pos        : (batch, time, box_per_frame, pos_channel)
    #   ops_weights: (batch, num_edges, num_ops),  num_edges = steps*(steps+1)/2
    B, T, Nb = 2, 4, 4
    C, Cg, Cp = 32, 32, 4
    steps, num_ops = 2, 4
    num_edges = steps * (steps + 1) // 2

    key = jax.random.PRNGKey(0)
    k_lf, k_gf, k_pos, k_w, k_p = jax.random.split(key, 5)

    local_feat = jax.random.normal(k_lf, (B, T, Nb, C), jnp.float32)
    global_feat = jax.random.normal(k_gf, (B, T, Cg), jnp.float32)
    pos = jax.random.normal(k_pos, (B, T, Nb, Cp), jnp.float32)
    ops_weights = jax.random.normal(k_w, (B, num_edges, num_ops), jnp.float32)
    params = init_nas_params(k_p, C, Cg, Cp, num_ops)

    # Performance path: bf16 operands + bf16 output, f32 MXU accumulation.
    out_bf16, var_bf16 = nas_layer_forward(
        local_feat, global_feat, pos, ops_weights, params,
        steps=steps, training=True, compute_dtype=jnp.bfloat16)
    out_bf16 = jax.block_until_ready(out_bf16)
    var_bf16 = jax.block_until_ready(var_bf16)

    # f32 path for tight numerical verification of the fused-DAG algebra.
    out_f32, var_f32 = nas_layer_forward(
        local_feat, global_feat, pos, ops_weights, params,
        steps=steps, training=True, compute_dtype=jnp.float32)
    out_f32 = jax.block_until_ready(out_f32)
    var_f32 = jax.block_until_ready(var_f32)

    assert out_bf16.shape == (B, T, Nb, steps * C), out_bf16.shape
    assert out_f32.shape == (B, T, Nb, steps * C), out_f32.shape
    assert var_bf16.shape == (), var_bf16.shape

    ref_out, ref_var = nas_layer_ref(
        local_feat, global_feat, pos, ops_weights, params, steps)

    assert jnp.allclose(out_f32, ref_out, atol=1e-4, rtol=1e-4)
    assert jnp.allclose(var_f32, ref_var, atol=1e-6, rtol=1e-6)
    assert jnp.allclose(out_bf16.astype(jnp.float32), ref_out,
                        atol=5e-2, rtol=5e-2)
    assert jnp.allclose(var_bf16, ref_var, atol=1e-6, rtol=1e-6)

    print("KERNEL_OK")
</pallas_src>

<mosaic_0001>
module attributes {stable_mosaic.version = 11 : i64} {
  func.func @_nas_dag_kernel(%arg0: i32, %arg1: i32, %arg2: memref<1x16x68xbf16, #tpu.memory_space<vmem>>, %arg3: memref<1x104x64xbf16, #tpu.memory_space<vmem>>, %arg4: memref<1x16x64xbf16, #tpu.memory_space<vmem>>, %arg5: memref<16x64xf32, #tpu.memory_space<vmem>>) attributes {dimension_semantics = [#tpu.dimension_semantics<parallel>, #tpu.dimension_semantics<parallel>], iteration_bounds = array<i64: 2, 1>, scalar_prefetch = 0 : i64, scratch_operands = 1 : i64, tpu.core_type = #tpu.core_type<tc>, window_params = [{transform_indices = @transform_0, window_bounds = array<i64: 1, 16, 68>}, {transform_indices = @transform_1, window_bounds = array<i64: 1, 104, 64>}, {transform_indices = @transform_2, window_bounds = array<i64: 1, 16, 64>}]} {
    %c0 = arith.constant 0 : index
    %c0_0 = arith.constant 0 : index
    %c0_1 = arith.constant 0 : index
    %0 = vector.load %arg2[%c0, %c0_0, %c0_1] : memref<1x16x68xbf16, #tpu.memory_space<vmem>>, vector<1x16x68xbf16>
    %1 = vector.shape_cast %0 : vector<1x16x68xbf16> to vector<16x68xbf16>
    %c0_2 = arith.constant 0 : index
    %c0_3 = arith.constant 0 : index
    %c0_4 = arith.constant 0 : index
    %2 = vector.load %arg3[%c0_2, %c0_3, %c0_4] : memref<1x104x64xbf16, #tpu.memory_space<vmem>>, vector<1x68x64xbf16>
    %3 = vector.shape_cast %2 : vector<1x68x64xbf16> to vector<68x64xbf16>
    %cst = arith.constant dense<0.000000e+00> : vector<16x64xf32>
    %4 = tpu.matmul %1, %3, %cst {dimension_numbers = #tpu.dot_dimension_numbers<[1], [0], [0], [1], [0, 0, 1, 1], [], []>} : vector<16x68xbf16>, vector<68x64xbf16>, vector<16x64xf32> -> vector<16x64xf32>
    %c0_5 = arith.constant 0 : index
    %c0_6 = arith.constant 0 : index
    %5 = vector.load %arg5[%c0_5, %c0_6] : memref<16x64xf32, #tpu.memory_space<vmem>>, vector<16x64xf32>
    tpu.vector_store %arg5[%c0_5, %c0_6], %4 {strides = array<i32>} : memref<16x64xf32, #tpu.memory_space<vmem>>, vector<16x64xf32>,
    %c0_7 = arith.constant 0 : index
    %c0_8 = arith.constant 0 : index
    %6 = vector.load %arg5[%c0_7, %c0_8] : memref<16x64xf32, #tpu.memory_space<vmem>>, vector<16x32xf32>
    %7 = arith.truncf %6 : vector<16x32xf32> to vector<16x32xbf16>
    %c0_9 = arith.constant 0 : index
    %c72 = arith.constant 72 : index
    %c32 = arith.constant 32 : index
    %8 = vector.load %arg3[%c0_9, %c72, %c32] : memref<1x104x64xbf16, #tpu.memory_space<vmem>>, vector<1x32x32xbf16>
    %9 = vector.shape_cast %8 : vector<1x32x32xbf16> to vector<32x32xbf16>
    %c0_10 = arith.constant 0 : index
    %c32_11 = arith.constant 32 : index
    %10 = vector.load %arg5[%c0_10, %c32_11] : memref<16x64xf32, #tpu.memory_space<vmem>>, vector<16x32xf32>
    %cst_12 = arith.constant dense<0.000000e+00> : vector<16x32xf32>
    %11 = tpu.matmul %7, %9, %cst_12 {dimension_numbers = #tpu.dot_dimension_numbers<[1], [0], [0], [1], [0, 0, 1, 1], [], []>} : vector<16x32xbf16>, vector<32x32xbf16>, vector<16x32xf32> -> vector<16x32xf32>
    %12 = arith.addf %10, %11 : vector<16x32xf32>
    %c0_13 = arith.constant 0 : index
    %c32_14 = arith.constant 32 : index
    %13 = vector.load %arg5[%c0_13, %c32_14] : memref<16x64xf32, #tpu.memory_space<vmem>>, vector<16x32xf32>
    tpu.vector_store %arg5[%c0_13, %c32_14], %12 {strides = array<i32>} : memref<16x64xf32, #tpu.memory_space<vmem>>, vector<16x32xf32>,
    %c0_15 = arith.constant 0 : index
    %c0_16 = arith.constant 0 : index
    %14 = vector.load %arg5[%c0_15, %c0_16] : memref<16x64xf32, #tpu.memory_space<vmem>>, vector<16x64xf32>
    %15 = arith.truncf %14 : vector<16x64xf32> to vector<16x64xbf16>
    %c0_17 = arith.constant 0 : index
    %c0_18 = arith.constant 0 : index
    %c0_19 = arith.constant 0 : index
    %16 = vector.load %arg4[%c0_17, %c0_18, %c0_19] : memref<1x16x64xbf16, #tpu.memory_space<vmem>>, vector<1x16x64xbf16>
    %17 = vector.shape_cast %16 : vector<1x16x64xbf16> to vector<16x64xbf16>
    %18 = vector.shape_cast %15 : vector<16x64xbf16> to vector<1x16x64xbf16>
    tpu.vector_store %arg4[%c0_17, %c0_18, %c0_19], %18 {strides = array<i32>} : memref<1x16x64xbf16, #tpu.memory_space<vmem>>, vector<1x16x64xbf16>,
    return
  }
  func.func @transform_0(%arg0: i32, %arg1: i32) -> (i32, i32, i32) {
    %c0_i32 = arith.constant 0 : i32
    %c0_i32_0 = arith.constant 0 : i32
    return %arg0, %arg1, %c0_i32 : i32, i32, i32
  }
  func.func @transform_1(%arg0: i32, %arg1: i32) -> (i32, i32, i32) {
    %c0_i32 = arith.constant 0 : i32
    %c0_i32_0 = arith.constant 0 : i32
    %c0_i32_1 = arith.constant 0 : i32
    return %arg0, %c0_i32, %c0_i32_0 : i32, i32, i32
  }
  func.func @transform_2(%arg0: i32, %arg1: i32) -> (i32, i32, i32) {
    %c0_i32 = arith.constant 0 : i32
    %c0_i32_0 = arith.constant 0 : i32
    return %arg0, %arg1, %c0_i32 : i32, i32, i32
  }
}

</mosaic_0001>

<llo_original>
// kernel: nas_layer_forward.1
$region0: #{nas_layer_forward.1}
  #allocation0 [shape = 'u32[]', space=smem, size = 0x4, offset = 0x4, fixed_abs, tag = 'smem constant byte address 0x4 - core index']
  #allocation1 [shape = 'u32[144,128]{1,0:T(1,128)}', space=vmem, size = 0x12000, scoped, tag = 'internal scratch']
  #allocation2 [shape = 'f32[16,64]{1,0:T(8,128)}', space=vmem, size = 0x2000, scoped, tag = 'scratch operand']
  %s0 = inlined_call_operand.vmem [shape: bf16[2,16,68], index: 0, kind: input, shape index: {}]
  %s1 = inlined_call_operand.vmem [shape: bf16[2,104,64], index: 1, kind: input, shape index: {}]
  %s2 = inlined_call_operand.hbm [shape: bf16[2,16,64], index: 2, kind: output, shape index: {}]
  %s3 = sld [smem:[#allocation0]]
  $region41: #{nas_layer_forward.1} parent=0
    _
  %s5 = ssub.s32 1, %s3
  %s6 = scalar_select 0, %s5, %s3
  $region1: #{nas_layer_forward.1} parent=0
    #allocation3 [shape = 'u8[8192]{0}', space=vmem, size = 0x2000, scoped, tag = 'output window, operand 0']
    #allocation4 [shape = 's32[2]{0}', space=sflag, size = 0x8, scoped, tag = 'scoped memory for nas_layer_forward.1']
    %7 = vsyncpa [#allocation4], 0
    %s8 = scalar_lea.sflag [#allocation4], 1
    %9 = vsyncpa %s8, 0
    loop: start=0, step=1, limit=4
    $region2: #{nas_layer_forward.1} parent=1 // loop_pre_header
      _
    $region3: #{nas_layer_forward.1} parent=1 // loop_header
      %s11 = sphi 0, %s15
      %p12 = scmp.ge.s32.totalorder %s11, 4
      %s18 = sphi 0, %s30
      %s19 = sphi 0, %s26
      %s20 = sphi 0, %s18
      %s21 = sphi 0, %s19
      %s22 = sphi 0, %s20
      %s23 = sphi 0, %s21
      %s35 = sphi 0, %s37
      %s38 = sphi 0, %s35
      %s39 = sphi 0, %s38
      %s55 = sphi 0, %s39
      %s61 = sphi 0, %s63
      %s64 = sphi 0, %s61
      %s65 = sphi 0, %s64
      %s81 = sphi 0, %s65
      %s89 = sphi 0, %s91
      %s92 = sphi 0, %s89
      %s93 = sphi 0, %s92
      %s109 = sphi 0, %s93
    $region4: #{nas_layer_forward.1} parent=1 // loop_header_branch
      %14 = sbr.rel (%p12) target = $region8
    $region5: #{nas_layer_forward.1} parent=1 // loop_body
      %s16 = ssub.s32 %s11, 1
      %s17 = ssub.s32 %s11, 2
      %s24 = sadd.s32 1, %s19
      %p25 = scmp.ge.s32.totalorder %s24, 1
      %s26 = scalar_select %p25, 0, %s24
      %s27 = sadd.s32 1, %s18
      %s28 = scalar_select %p25, %s27, %s18
      %p29 = scmp.ge.s32.totalorder %s28, 2
      %s30 = scalar_select %p29, 0, %s28
      %s31 = ssub.s32 %s18, %s30
      %s32 = ssub.s32 %s19, %s26
      %s33 = sor.u32 %s31, %s32
      %p34 = scmp.eq.s32.totalorder %s33, 0
      %s36 = sadd.s32 %s35, 1
      %s37 = scalar_select %p34, %s35, %s36
      %p40 = pneg %p34
      %p41 = scmp.eq.s32.totalorder %s11, 1
      %p42 = por %p40, %p41
      %p43 = scmp.ne.s32.totalorder %s35, %s38
      %p44 = scmp.eq.s32.totalorder %s11, 0
      %p45 = por %p43, %p44
      %p46 = scmp.ne.s32.totalorder %s35, %s38
      %p47 = scmp.eq.s32.totalorder %s16, 1
      %p48 = por %p46, %p47
      %p49 = scmp.ne.s32.totalorder %s38, %s39
      %p50 = scmp.eq.s32.totalorder %s16, 0
      %p51 = por %p49, %p50
      %p52 = scmp.ne.s32.totalorder %s38, %s39
      %p53 = scmp.eq.s32.totalorder %s17, 1
      %p54 = por %p52, %p53
      %p56 = scmp.ne.s32.totalorder %s39, %s55
      %p57 = scmp.eq.s32.totalorder %s17, 0
      %p58 = por %p56, %p57
      %s59 = ssub.s32 %s18, %s30
      %p60 = scmp.eq.s32.totalorder %s59, 0
      %s62 = sadd.s32 %s61, 1
      %s63 = scalar_select %p60, %s61, %s62
      %p66 = pneg %p60
      %p67 = scmp.eq.s32.totalorder %s11, 1
      %p68 = por %p66, %p67
      %p69 = scmp.ne.s32.totalorder %s61, %s64
      %p70 = scmp.eq.s32.totalorder %s11, 0
      %p71 = por %p69, %p70
      %p72 = scmp.ne.s32.totalorder %s61, %s64
      %p73 = scmp.eq.s32.totalorder %s16, 1
      %p74 = por %p72, %p73
      %p75 = scmp.ne.s32.totalorder %s64, %s65
      %p76 = scmp.eq.s32.totalorder %s16, 0
      %p77 = por %p75, %p76
      %p78 = scmp.ne.s32.totalorder %s64, %s65
      %p79 = scmp.eq.s32.totalorder %s17, 1
      %p80 = por %p78, %p79
      %p82 = scmp.ne.s32.totalorder %s65, %s81
      %p83 = scmp.eq.s32.totalorder %s17, 0
      %p84 = por %p82, %p83
      %s85 = ssub.s32 %s18, %s30
      %s86 = ssub.s32 %s19, %s26
      %s87 = sor.u32 %s85, %s86
      %p88 = scmp.eq.s32.totalorder %s87, 0
      %s90 = sadd.s32 %s89, 1
      %s91 = scalar_select %p88, %s89, %s90
      %p94 = pneg %p88
      %p95 = scmp.eq.s32.totalorder %s11, 1
      %p96 = por %p94, %p95
      %p97 = scmp.ne.s32.totalorder %s89, %s92
      %p98 = scmp.eq.s32.totalorder %s11, 0
      %p99 = por %p97, %p98
      %p100 = scmp.ne.s32.totalorder %s89, %s92
      %p101 = scmp.eq.s32.totalorder %s16, 1
      %p102 = por %p100, %p101
      %p103 = scmp.ne.s32.totalorder %s92, %s93
      %p104 = scmp.eq.s32.totalorder %s16, 0
      %p105 = por %p103, %p104
      %p106 = scmp.ne.s32.totalorder %s92, %s93
      %p107 = scmp.eq.s32.totalorder %s17, 1
      %p108 = por %p106, %p107
      %p110 = scmp.ne.s32.totalorder %s93, %s109
      %p111 = scmp.eq.s32.totalorder %s17, 0
      %p112 = por %p110, %p111
      %p113 = scmp.le.s32.totalorder 1, %s11
      %p114 = scmp.lt.s32.totalorder %s11, 3
      %p115 = pnand %p113, %p114
      %p116 = pneg %p115
      // Predicated region
      $region9: #{nas_layer_forward.1} parent=5 // pred_check
        _
      $region10: #{nas_layer_forward.1} parent=5 // pred_check_branch
        %118 = sbr.rel (%p115) target = $region12
      $region11: #{nas_layer_forward.1} parent=5 // pred_region
        %s119 = ssub.s32 %s11, 1
      $region12: #{nas_layer_forward.1} parent=5 // pred_fallthru
        _
      %p120 = scmp.lt.s32.totalorder %s11, 2
      // Predicated region
      $region13: #{nas_layer_forward.1} parent=5 // pred_check
        %p121 = pneg %p120
      $region14: #{nas_layer_forward.1} parent=5 // pred_check_branch
        %123 = sbr.rel (%p121) target = $region16
      $region15: #{nas_layer_forward.1} parent=5 // pred_region
        // Predicated region
        $region17: #{nas_layer_forward.1} parent=15 // pred_check
          %p124 = pneg %p45
        $region18: #{nas_layer_forward.1} parent=15 // pred_check_branch
          %126 = sbr.rel (%p124) target = $region20
        $region19: #{nas_layer_forward.1} parent=15 // pred_region
          %s127 = smul.u32 2, %s19
          %p128 = scmp.lt.s32.totalorder %s18, 1
          %s129 = scalar_select %p128, %s18, 1
          %p130 = scmp.lt.s32.totalorder %s127, 1
          %s131 = scalar_select %p130, %s127, 1
          %s132 = smul.addr %s129, 2
          %s133 = sadd.s32 %s131, %s132
          %s134 = smul.addr %s133, 4
          %s135 = scalar_lea.vmem %s0, %s134
          %s136 = smul.u32 2, %s19
        $region20: #{nas_layer_forward.1} parent=15 // pred_fallthru
          _
        // Predicated region
        $region21: #{nas_layer_forward.1} parent=15 // pred_check
          %p137 = pneg %p71
        $region22: #{nas_layer_forward.1} parent=15 // pred_check_branch
          %139 = sbr.rel (%p137) target = $region24
        $region23: #{nas_layer_forward.1} parent=15 // pred_region
          %p140 = scmp.lt.s32.totalorder %s18, 1
          %s141 = scalar_select %p140, %s18, 1
          %s142 = smul.addr %s141, 13
          %s143 = smul.addr %s142, 4
          %s144 = scalar_lea.vmem %s1, %s143
        $region24: #{nas_layer_forward.1} parent=15 // pred_fallthru
          _
      $region16: #{nas_layer_forward.1} parent=5 // pred_fallthru
        _
      %p145 = scmp.le.s32.totalorder 1, %s11
      %p146 = scmp.lt.s32.totalorder %s11, 3
      %p147 = pnand %p145, %p146
      %p148 = pneg %p147
      // Predicated region
      $region25: #{nas_layer_forward.1} parent=5 // pred_check
        _
      $region26: #{nas_layer_forward.1} parent=5 // pred_check_branch
        %150 = sbr.rel (%p147) target = $region28
      $region27: #{nas_layer_forward.1} parent=5 // pred_region
        %s151 = ssub.s32 %s11, 1
        %s152 = smul.u32 2, %s21
        %p153 = scmp.lt.s32.totalorder %s20, 1
        %s154 = scalar_select %p153, %s20, 1
        %p155 = scmp.lt.s32.totalorder %s152, 1
        %s156 = scalar_select %p155, %s152, 1
        %s157 = smul.addr %s154, 2
        %s158 = sadd.s32 %s156, %s157
        %s159 = smul.addr %s158, 4
        %s160 = scalar_lea.vmem %s0, %s159
        %p161 = pneg %p51
        %p162 = pneg %p48
        %p163 = scmp.lt.s32.totalorder %s20, 1
        %s164 = scalar_select %p163, %s20, 1
        %s165 = smul.addr %s164, 13
        %s166 = smul.addr %s165, 4
        %s167 = scalar_lea.vmem %s1, %s166
        %p168 = pneg %p77
        %p169 = pneg %p74
        %p170 = pneg %p105
        %p171 = pneg %p102
        %s172 = sand.u32 %s92, 1
        %s173 = scalar_lea.sflag [#allocation4], %s172
        %s174 = sand.u32 %s92, 1
        %s175 = smul.addr %s174, 8
        %s176 = scalar_lea.vmem [#allocation3], %s175
        %s177 = smul.u32 2, %s21
        %p178 = scmp.lt.s32.totalorder %s20, 1
        %s179 = scalar_select %p178, %s20, 1
        %p180 = scmp.lt.s32.totalorder %s177, 1
        %s181 = scalar_select %p180, %s177, 1
        %s182 = smul.addr %s179, 2
        %s183 = sadd.s32 %s181, %s182
        %s184 = smul.addr %s183, 4
        %s185 = scalar_lea.vmem %s0, %s184
        %s186 = smul.u32 2, %s21
        %p187 = scmp.lt.s32.totalorder %s20, 1
        %s188 = scalar_select %p187, %s20, 1
        %s189 = smul.addr %s188, 13
        %s190 = smul.addr %s189, 4
        %s191 = scalar_lea.vmem %s1, %s190
        %s192 = smul.u32 2, %s21
        %v194 = vld [vmem:[%s185] sm:$0xf]
        %v195 = vld [vmem:[%s185 + $0x4] sm:$0xf]
        %v196 = vld [vmem:[%s191] sm:$0xf]
        %v197 = vld [vmem:[%s191 + $0x4] sm:$0xf]
        %v198 = vld [vmem:[%s191 + $0x8] sm:$0xf]
        %v199 = vld [vmem:[%s191 + $0xc] sm:$0xf]
        %v200 = vld [vmem:[%s191 + $0x10] sm:$0xf]
        %v201 = vld [vmem:[%s191 + $0x14] sm:$0xf]
        %v202 = vld [vmem:[%s191 + $0x18] sm:$0xf]
        %v203 = vld [vmem:[%s191 + $0x1c] sm:$0xf]
        %v204 = vld [vmem:[%s191 + $0x20] sm:$0x3]
        %v207 = vunpack.c.l.b16 %v194
        %v208 = vunpack.c.l.b16 %v195
        %v209 = vpack.c.b16 %v208, %v207
        %v219 = vunpack.c.l.b16 %v196
        %v220 = vunpack.c.l.b16 %v197
        %v221 = vunpack.c.l.b16 %v198
        %v222 = vunpack.c.l.b16 %v199
        %v223 = vunpack.c.l.b16 %v200
        %v224 = vunpack.c.l.b16 %v201
        %v225 = vunpack.c.l.b16 %v202
        %v226 = vunpack.c.l.b16 %v203
        %v227 = vunpack.c.l.b16 %v204
        %v228 = vpack.c.b16 %v220, %v219
        %v229 = vpack.c.b16 %v222, %v221
        %v230 = vpack.c.b16 %v224, %v223
        %v231 = vpack.c.b16 %v226, %v225
        %v232 = vpack.c.b16 %v227, %v227
        %vm237 = vcmask 556032
        %v239 = vsel %vm237, %v209, 0
        %vm241 = vcmask 1041408
        %v243 = vsel %vm241, %v232, 0
        %245 = vmatprep.subr.bf16.mxu0 0
        %246 = vmatpush1.bf16.msra.mxu0 %v228
        %247 = vmatprep.subr.bf16.mxu0 0
        %248 = vmatpush1.bf16.msra.mxu0 %v229
        %249 = vmatprep.subr.bf16.mxu0 0
        %250 = vmatpush1.bf16.msra.mxu0 %v230
        %251 = vmatprep.subr.bf16.mxu0 0
        %252 = vmatpush1.bf16.msra.mxu0 %v231
        %253 = vmatprep.subr.bf16.mxu0 0
        %254 = vmatpush1.bf16.msra.mxu0 %v243
        %255 = vmatprep.subr.bf16.mxu0 0
        %256 = vmatpush1.bf16.msra.mxu0 0
        %257 = vmatprep.subr.bf16.mxu0 0
        %258 = vmatpush1.bf16.msra.mxu0 0
        %259 = vmatprep.subr.bf16.mxu0 0
        %260 = vmatpush1.bf16.msra.mxu0 0
        %261 = vmatprep.subr.bf16.mxu0 0
        %262 = vmatpush1.bf16.msra.mxu0 0
        %263 = vmatprep.subr.bf16.mxu0 0
        %264 = vmatpush1.bf16.msra.mxu0 0
        %265 = vmatprep.subr.bf16.mxu0 0
        %266 = vmatpush1.bf16.msra.mxu0 0
        %267 = vmatprep.subr.bf16.mxu0 0
        %268 = vmatpush1.bf16.msra.mxu0 0
        %269 = vmatprep.subr.bf16.mxu0 0
        %270 = vmatpush1.bf16.msra.mxu0 0
        %271 = vmatprep.subr.bf16.mxu0 0
        %272 = vmatpush1.bf16.msra.mxu0 0
        %273 = vmatprep.subr.bf16.mxu0 0
        %274 = vmatpush1.bf16.msra.mxu0 0
        %275 = vmatprep.subr.bf16.mxu0 0
        %276 = vmatpush1.bf16.msra.mxu0 0
        %277 = vmatprep.mubr.bf16.mxu0 0
        %278 = vmatmul.mubr.bf16.gmra.mrb[0].mxu0 %v239
        %v279 = vpop.f32.mrb[0].mxu0
        %v280 = vadd.f32 0.0, %v279
        %v281 = vpop.f32.mrb[0].mxu0
        %v282 = vpop.f32.mrb[0].mxu0
        %v283 = vadd.f32 0.0, %v282
        %v284 = vpop.f32.mrb[0].mxu0
        %285 = vdwg.mxu0
        %vm286 = vcmask 523264
        %287 = vst.msk [vmem:[#allocation2] sm:$0xff] %vm286, %v280
        %288 = vst.msk [vmem:[#allocation2 + $0x8] sm:$0xff] %vm286, %v283
        %v289 = vld [vmem:[#allocation2] sm:$0xff]
        %v290 = vld [vmem:[#allocation2 + $0x8] sm:$0xff]
        %v291 = vpack.c.bf16 %v290, %v289
        %v292 = vld [vmem:[%s191 + $0x24] sm:$0xf]
        %v293 = vld [vmem:[%s191 + $0x28] sm:$0xf]
        %v294 = vld [vmem:[%s191 + $0x2c] sm:$0xf]
        %v295 = vld [vmem:[%s191 + $0x30] sm:$0xf]
        %v300 = vunpack.c.l.b16 %v292
        %v301 = vunpack.c.l.b16 %v293
        %v302 = vunpack.c.l.b16 %v294
        %v303 = vunpack.c.l.b16 %v295
        %v304 = vpack.c.b16 %v301, %v300
        %v305 = vpack.c.b16 %v303, %v302
        %306 = vrot.lane.b32.xlu0 %v304, 96
        %v307 = vpop.permute.xlu0 %306
        %308 = vrot.lane.b32.xlu0 %v305, 96
        %v309 = vpop.permute.xlu0 %308
        %vm312 = vcmask 261120
        %v314 = vsel %vm312, %v291, 0
        %316 = vmatprep.subr.bf16.mxu0 0
        %317 = vmatpush1.bf16.msra.mxu0 %v307
        %318 = vmatprep.subr.bf16.mxu0 0
        %319 = vmatpush1.bf16.msra.mxu0 %v309
        %320 = vmatprep.subr.bf16.mxu0 0
        %321 = vmatpush1.bf16.msra.mxu0 0
        %322 = vmatprep.subr.bf16.mxu0 0
        %323 = vmatpush1.bf16.msra.mxu0 0
        %324 = vmatprep.subr.bf16.mxu0 0
        %325 = vmatpush1.bf16.msra.mxu0 0
        %326 = vmatprep.subr.bf16.mxu0 0
        %327 = vmatpush1.bf16.msra.mxu0 0
        %328 = vmatprep.subr.bf16.mxu0 0
        %329 = vmatpush1.bf16.msra.mxu0 0
        %330 = vmatprep.subr.bf16.mxu0 0
        %331 = vmatpush1.bf16.msra.mxu0 0
        %332 = vmatprep.subr.bf16.mxu0 0
        %333 = vmatpush1.bf16.msra.mxu0 0
        %334 = vmatprep.subr.bf16.mxu0 0
        %335 = vmatpush1.bf16.msra.mxu0 0
        %336 = vmatprep.subr.bf16.mxu0 0
        %337 = vmatpush1.bf16.msra.mxu0 0
        %338 = vmatprep.subr.bf16.mxu0 0
        %339 = vmatpush1.bf16.msra.mxu0 0
        %340 = vmatprep.subr.bf16.mxu0 0
        %341 = vmatpush1.bf16.msra.mxu0 0
        %342 = vmatprep.subr.bf16.mxu0 0
        %343 = vmatpush1.bf16.msra.mxu0 0
        %344 = vmatprep.subr.bf16.mxu0 0
        %345 = vmatpush1.bf16.msra.mxu0 0
        %346 = vmatprep.subr.bf16.mxu0 0
        %347 = vmatpush1.bf16.msra.mxu0 0
        %348 = vmatprep.mubr.bf16.mxu0 0
        %349 = vmatmul.mubr.bf16.gmra.mrb[0].mxu0 %v314
        %v350 = vpop.f32.mrb[0].mxu0
        %v351 = vadd.f32 0.0, %v350
        %v352 = vpop.f32.mrb[0].mxu0
        %v353 = vpop.f32.mrb[0].mxu0
        %v354 = vadd.f32 0.0, %v353
        %v355 = vpop.f32.mrb[0].mxu0
        %356 = vdwg.mxu0
        %359 = vrot.lane.b32.xlu0 %v351, 32
        %v360 = vpop.permute.xlu0 %359
        %361 = vrot.lane.b32.xlu0 %v354, 32
        %v362 = vpop.permute.xlu0 %361
        %v365 = vadd.f32 %v289, %v360
        %v366 = vadd.f32 %v290, %v362
        %vm367 = vcmask 523520
        %368 = vst.msk [vmem:[#allocation2] sm:$0xff] %vm367, %v365
        %369 = vst.msk [vmem:[#allocation2 + $0x8] sm:$0xff] %vm367, %v366
        %v370 = vld [vmem:[#allocation2] sm:$0xff]
        %v371 = vld [vmem:[#allocation2 + $0x8] sm:$0xff]
        %v372 = vpack.c.bf16 %v371, %v370
        %v374 = vunpack.c.l.b16 %v372
        %v375 = vunpack.c.h.b16 %v372
        %v376 = vpack.c.b16 %v374, %v374
        %v377 = vpack.c.b16 %v375, %v375
        %vm380 = vcmask 519168
        %381 = vst.msk [vmem:[%s176] sm:$0xf] %vm380, %v376
        %382 = vst.msk [vmem:[%s176 + $0x4] sm:$0xf] %vm380, %v377
        %s383 = sand.u32 %s92, 1
        %s384 = scalar_lea.sflag [#allocation4], %s383
        %s385 = sand.u32 %s92, 1
        %s386 = smul.addr %s385, 8
        %s387 = scalar_lea.vmem [#allocation3], %s386
        // Predicated region
        $region29: #{nas_layer_forward.1} parent=27 // pred_check
          %p388 = pneg %p102
        $region30: #{nas_layer_forward.1} parent=27 // pred_check_branch
          %390 = sbr.rel (%p388) target = $region32
        $region31: #{nas_layer_forward.1} parent=27 // pred_region
          %s391 = smul.u32 2, %s21
          %s393 = ssub.s32 128, 128
          %394 = vsyncadd %s384, %s393
          %s395 = smul.addr %s20, 2
          %s396 = sadd.s32 %s391, %s395
          %s397 = smul.addr %s396, 64
          %s398 = scalar_lea.hbm %s2, %s397
          %s399 = sshll.u32 %s387, 4
          %s400 = int_to_ptr.vmem [resolvable:$true] %s399
          %405 = dma.vmem_to_hbm [thread:$0]  %s400, 128, %s398, %s384, 64, 64, 4
        $region32: #{nas_layer_forward.1} parent=27 // pred_fallthru
          _
      $region28: #{nas_layer_forward.1} parent=5 // pred_fallthru
        _
      %p406 = scmp.le.s32.totalorder 2, %s11
      // Predicated region
      $region33: #{nas_layer_forward.1} parent=5 // pred_check
        %p407 = pneg %p406
      $region34: #{nas_layer_forward.1} parent=5 // pred_check_branch
        %409 = sbr.rel (%p407) target = $region36
      $region35: #{nas_layer_forward.1} parent=5 // pred_region
        %s410 = ssub.s32 %s11, 2
        // Predicated region
        $region37: #{nas_layer_forward.1} parent=35 // pred_check
          %p411 = pneg %p108
        $region38: #{nas_layer_forward.1} parent=35 // pred_check_branch
          %413 = sbr.rel (%p411) target = $region40
        $region39: #{nas_layer_forward.1} parent=35 // pred_region
          %s414 = sand.u32 %s93, 1
          %s415 = scalar_lea.sflag [#allocation4], %s414
          %s416 = sand.u32 %s93, 1
          %s417 = smul.addr %s416, 8
          %s418 = scalar_lea.vmem [#allocation3], %s417
          %419 = dma.done %s415, 128
        $region40: #{nas_layer_forward.1} parent=35 // pred_fallthru
          _
      $region36: #{nas_layer_forward.1} parent=5 // pred_fallthru
        _
    $region6: #{nas_layer_forward.1} parent=1 // loop_footer
      %s15 = sadd.s32 1, %s11
    $region7: #{nas_layer_forward.1} parent=1 // loop_footer_branch
      %10 = sbr.rel target = $region3
    $region8: #{nas_layer_forward.1} parent=1 // loop_exit
      _
    %420 = vsyncpa [#allocation4], 1
    %s421 = scalar_lea.sflag [#allocation4], 1
    %422 = vsyncpa %s421, 1

</llo_original>
